<compile_context>
chip_gen: v5e
topology: v5e:2x2
jax: 0.10.0
libtpu: 0.0.40
codegen_flags: <defaults>
</compile_context>

<pallas_src>
import math

import jax
import jax.numpy as jnp
from jax.experimental import pallas as pl
from jax.experimental.pallas import tpu as pltpu

_EPS = 1e-7
# logit(clamp(sigmoid(z), eps, 1-eps)) == clamp(z, -Z, +Z), Z = log((1-eps)/eps)
_Z_CLAMP = math.log((1.0 - _EPS) / _EPS)   # ~16.118095...

_LANE = 128      # lanes per vreg (fast axis quantum)
_SUBLANE = 8     # sublanes per vreg


def _round_down(v, m):
    return (v // m) * m


def _choose_block_rows(batch, bytes_per_row,
                       target_block_bytes=4 << 20,
                       max_block_bytes=8 << 20):
    """Rows of x per grid step.

    * ~target_block_bytes of x per pipeline buffer (HBM streaming saturates
      around 1-4 MiB blocks; fixed per-step overhead amortized),
    * rounded to a multiple of 128 rows (full vregs / aligned DMA / lane-dense
      output tiles),
    * and, whenever the batch is split, an even tile count >= 2 so v7x's two
      TensorCores get balanced work on the `parallel` batch axis.
    """
    if batch <= 2 * _LANE:
        return batch                                  # tiny batch: one full block
    tb = max(_LANE, _round_down(target_block_bytes // bytes_per_row, _LANE))
    # graceful clamp for very wide rows so a single block cannot blow VMEM
    tb = min(tb, max(_SUBLANE,
                     _round_down(max_block_bytes // bytes_per_row, _SUBLANE)))
    n_tiles = max(2, pl.cdiv(batch, tb))
    if n_tiles % 2:                                   # even grid for megacore
        n_tiles += 1
    tb = min(tb, pl.cdiv(pl.cdiv(batch, n_tiles), _LANE) * _LANE)
    return max(_SUBLANE, min(tb, batch))


def logit_wrapper_kernel(x_ref, w_ref, b_ref, o_ref):
    # Wrapped "model": binary linear head.  Contract the feature axis of BOTH
    # operands (q @ k.T style) so per-example scores land lane-dense as a
    # (1, tb) row: no (tb, 1) column store and no relayout.  w_ref carries the
    # real weights in row 0 (rows 1..7 are zero padding so the MXU sees a full
    # 8-sublane stationary operand).
    z = jax.lax.dot_general(
        w_ref[...], x_ref[...],
        dimension_numbers=(((1,), (1,)), ((), ())),
        preferred_element_type=jnp.float32,
    )
    z0 = z[0:1, :] + b_ref[0]
    # LogitWrapper: p = sigmoid(z); p = clamp(p, eps, 1-eps); log(p/(1-p)).
    # Exactly equal to clamp(z, -Z, +Z) with Z = log((1-eps)/eps) -- zero
    # transcendentals and no 1-p cancellation.  (A literal f32 emulation would
    # saturate the upper side near ~15.94 only because f32(1 - 1e-7) rounds to
    # 1 - 2^-23; we keep the exact, symmetric bound.)
    o_ref[...] = (jnp.clip(z0, -_Z_CLAMP, _Z_CLAMP)
                  .reshape(o_ref.shape).astype(o_ref.dtype))


def logit_wrapper(x, w, b, *, target_block_bytes=4 << 20):
    """p = sigmoid(x @ w + b), clamped to [1e-7, 1-1e-7]; returns log(p/(1-p)).

    x: [B, H] f32, w: [H, 1] f32, b: [1] f32  ->  logits [B, 1] f32.
    """
    B, H = x.shape
    assert w.shape == (H, 1) and b.shape == (1,)

    # Weight row, zero-padded to a full 8-sublane tile; resident across tiles.
    w_rows = jnp.pad(w.reshape(1, H), ((0, _SUBLANE - 1), (0, 0)))

    itemsize = x.dtype.itemsize
    tb = _choose_block_rows(B, H * itemsize, target_block_bytes)
    n_tiles = pl.cdiv(B, tb)

    # VMEM this kernel actually needs (x double-buffered by the pipeline).
    need = (2 * tb * H * itemsize            # streamed x tiles
            + 2 * _SUBLANE * H * 4           # resident weight rows
            + 2 * tb * 4                     # lane-dense output rows
            + (1 << 20))                     # slack
    vmem_limit_bytes = 24 << 20              # safe on v5e/v6e/v7x (64 MiB phys)
    assert need <= vmem_limit_bytes, (
        f"x tile ({tb}x{H}) needs ~{need >> 20} MiB VMEM; tile the feature "
        "dimension for inputs this wide")
    # TODO(synk): LogitWrapper wraps an arbitrary probability model; only a
    # deterministic linear+sigmoid binary head is implemented here.
    # (Optional further win: stream x as bf16 -- contract change, not done.)

    cost = pl.CostEstimate(
        flops=2 * B * H,
        transcendentals=0,
        bytes_accessed=B * H * itemsize + _SUBLANE * H * 4 + 4 + n_tiles * tb * 4,
    )

    out = pl.pallas_call(
        logit_wrapper_kernel,
        out_shape=jax.ShapeDtypeStruct((n_tiles, 1, tb), jnp.float32),
        grid=(n_tiles,),
        in_specs=[
            pl.BlockSpec((tb, H), lambda i: (i, 0)),            # streamed x
            pl.BlockSpec((_SUBLANE, H), lambda i: (0, 0)),      # resident weights
            pl.BlockSpec(memory_space=pltpu.MemorySpace.SMEM),  # scalar bias
        ],
        out_specs=pl.BlockSpec((1, 1, tb), lambda i: (i, 0, 0)),  # lane-dense rows
        compiler_params=pltpu.CompilerParams(
            dimension_semantics=("parallel",),   # megacore split of the batch
            vmem_limit_bytes=vmem_limit_bytes,
        ),
        cost_estimate=cost,
    )(x, w_rows, b)

    # (n_tiles, 1, tb) lane-dense slab -> (B, 1); drop padded tail rows.
    return out.reshape(-1)[:B].reshape(B, 1)


if __name__ == "__main__":
    key = jax.random.PRNGKey(0)
    kx, kw, kb = jax.random.split(key, 3)

    B, H = 8, 32
    # bf16-representable f32 values: the check is then independent of whatever
    # pass-decomposition the MXU (or XLA) uses for f32 matmuls.
    q = lambda a: a.astype(jnp.bfloat16).astype(jnp.float32)
    x = q(jax.random.normal(kx, (B, H), dtype=jnp.float32))
    w = q(jax.random.normal(kw, (H, 1), dtype=jnp.float32) * 0.1)
    b = q(jax.random.normal(kb, (1,), dtype=jnp.float32) * 0.1)

    logits = jax.block_until_ready(logit_wrapper(x, w, b))

    # Literal PyTorch-style reference (valid here: |z| is small, so the
    # sigmoid -> clamp -> log(p/(1-p)) round trip is still accurate in f32).
    z_ref = x @ w + b[0]
    p_ref = jnp.clip(jax.nn.sigmoid(z_ref), _EPS, 1.0 - _EPS)
    ref = jnp.log(p_ref / (1.0 - p_ref))
    assert jnp.allclose(logits, ref, atol=1e-4), (logits, ref)

    # Clamp path: scale x by a power of two (stays bf16-exact) so |z| exceeds
    # log((1-eps)/eps).  Compare against the analytic clamped-z form, which is
    # the module's exact math; the literal f32 path loses precision to 1-p
    # cancellation for 8 < |z| < 16 and rounds the upper bound to ~15.94.
    x_big = x * 64.0
    logits_big = jax.block_until_ready(logit_wrapper(x_big, w, b))
    ref_big = jnp.clip(x_big @ w + b[0], -_Z_CLAMP, _Z_CLAMP)
    assert jnp.allclose(logits_big, ref_big, atol=1e-3), (logits_big, ref_big)

    print("KERNEL_OK")
</pallas_src>

<mosaic_0001>
module attributes {stable_mosaic.version = 11 : i64} {
  func.func @logit_wrapper_kernel(%arg0: i32, %arg1: memref<8x32xf32, #tpu.memory_space<vmem>>, %arg2: memref<8x32xf32, #tpu.memory_space<vmem>>, %arg3: memref<1xf32, #tpu.memory_space<smem>>, %arg4: memref<1x1x8xf32, #tpu.memory_space<vmem>>) attributes {dimension_semantics = [#tpu.dimension_semantics<parallel>], iteration_bounds = array<i64: 1>, scalar_prefetch = 0 : i64, scratch_operands = 0 : i64, tpu.core_type = #tpu.core_type<tc>, window_params = [{transform_indices = @transform_0, window_bounds = array<i64: 8, 32>}, {pipeline_mode = #tpu.pipeline_mode<synchronous>, transform_indices = @transform_1, window_bounds = array<i64: 8, 32>}, {transform_indices = @transform_2, window_bounds = array<i64: 1>}, {transform_indices = @transform_3, window_bounds = array<i64: 1, 1, 8>}]} {
    %c0 = arith.constant 0 : index
    %c0_0 = arith.constant 0 : index
    %0 = vector.load %arg2[%c0, %c0_0] : memref<8x32xf32, #tpu.memory_space<vmem>>, vector<8x32xf32>
    %c0_1 = arith.constant 0 : index
    %c0_2 = arith.constant 0 : index
    %1 = vector.load %arg1[%c0_1, %c0_2] : memref<8x32xf32, #tpu.memory_space<vmem>>, vector<8x32xf32>
    %cst = arith.constant dense<0.000000e+00> : vector<8x8xf32>
    %2 = tpu.matmul %0, %1, %cst {dimension_numbers = #tpu.dot_dimension_numbers<[1], [1], [0], [0], [0, 0, 1, 0], [], []>} : vector<8x32xf32>, vector<8x32xf32>, vector<8x8xf32> -> vector<8x8xf32>
    %3 = vector.extract_strided_slice %2 {offsets = [0, 0], sizes = [1, 8], strides = [1, 1]} : vector<8x8xf32> to vector<1x8xf32>
    %c0_3 = arith.constant 0 : index
    %4 = memref.load %arg3[%c0_3] : memref<1xf32, #tpu.memory_space<smem>>
    %5 = vector.broadcast %4 : f32 to vector<1x8xf32>
    %6 = arith.addf %3, %5 : vector<1x8xf32>
    %cst_4 = arith.constant -16.1180954 : f32
    %cst_5 = arith.constant 16.1180954 : f32
    %7 = vector.broadcast %cst_4 : f32 to vector<1x8xf32>
    %8 = arith.maximumf %7, %6 : vector<1x8xf32>
    %9 = vector.broadcast %cst_5 : f32 to vector<1x8xf32>
    %10 = arith.minimumf %9, %8 : vector<1x8xf32>
    %11 = vector.shape_cast %10 : vector<1x8xf32> to vector<1x1x8xf32>
    %c0_6 = arith.constant 0 : index
    %c0_7 = arith.constant 0 : index
    %c0_8 = arith.constant 0 : index
    %12 = vector.load %arg4[%c0_6, %c0_7, %c0_8] : memref<1x1x8xf32, #tpu.memory_space<vmem>>, vector<1x1x8xf32>
    tpu.vector_store %arg4[%c0_6, %c0_7, %c0_8], %11 {strides = array<i32>} : memref<1x1x8xf32, #tpu.memory_space<vmem>>, vector<1x1x8xf32>,
    return
  }
  func.func @transform_0(%arg0: i32) -> (i32, i32) {
    %c0_i32 = arith.constant 0 : i32
    %c0_i32_0 = arith.constant 0 : i32
    return %arg0, %c0_i32 : i32, i32
  }
  func.func @transform_1(%arg0: i32) -> (i32, i32) {
    %c0_i32 = arith.constant 0 : i32
    %c0_i32_0 = arith.constant 0 : i32
    %c0_i32_1 = arith.constant 0 : i32
    return %c0_i32, %c0_i32_0 : i32, i32
  }
  func.func @transform_2(%arg0: i32) -> i32 {
    %c0_i32 = arith.constant 0 : i32
    %c0_i32_0 = arith.constant 0 : i32
    return %c0_i32 : i32
  }
  func.func @transform_3(%arg0: i32) -> (i32, i32, i32) {
    %c0_i32 = arith.constant 0 : i32
    %c0_i32_0 = arith.constant 0 : i32
    %c0_i32_1 = arith.constant 0 : i32
    return %arg0, %c0_i32, %c0_i32_0 : i32, i32, i32
  }
}

</mosaic_0001>

<llo_original>
// kernel: tpu_custom_call.1
$region0: #{tpu_custom_call.1}
  #allocation0 [shape = 'u32[]', space=smem, size = 0x4, offset = 0x4, fixed_abs, tag = 'smem constant byte address 0x4 - core index']
  #allocation1 [shape = 'u32[72,128]{1,0:T(1,128)}', space=vmem, size = 0x9000, scoped, tag = 'internal scratch']
  #allocation2 [shape = 'f32[1]{0:T(128)S(6)}', space=smem, size = 0x200, scoped, tag = 'scoped memory for tpu_custom_call.1']
  %s0 = inlined_call_operand.hbm [shape: f32[8,32], index: 0, kind: input, shape index: {}]
  %s1 = inlined_call_operand.hbm [shape: f32[8,32], index: 1, kind: input, shape index: {}]
  %s2 = inlined_call_operand.<no memory space> [shape: f32[1], index: 2, kind: input, shape index: {}]
  %s3 = inlined_call_operand.hbm [shape: f32[1,1,8], index: 3, kind: output, shape index: {}]
  %s4 = sld [smem:[#allocation0]]
  $region30: #{tpu_custom_call.1} parent=0
    _
  %s6 = ssub.s32 1, %s4
  %s7 = scalar_select 0, %s6, %s4
  %8 = sst [smem:[#allocation2]] %s2
  $region1: #{tpu_custom_call.1} parent=0
    #allocation3 [shape = 'u8[4096]{0}', space=vmem, size = 0x1000, scoped, tag = 'input window, operand 0, single buffered']
    #allocation4 [shape = 's32[1]{0}', space=sflag, size = 0x4, scoped, tag = 'scoped memory for tpu_custom_call.1']
    #allocation5 [shape = 's32[1]{0}', space=sflag, size = 0x4, scoped, tag = 'scoped memory for tpu_custom_call.1']
    #allocation6 [shape = 'u8[4096]{0}', space=vmem, size = 0x1000, scoped, tag = 'input window, operand 1, single buffered']
    #allocation7 [shape = 's32[1]{0}', space=sflag, size = 0x4, scoped, tag = 'scoped memory for tpu_custom_call.1']
    #allocation8 [shape = 'u8[512]{0}', space=vmem, size = 0x400, scoped, tag = 'output window, operand 0, single buffered']
    %9 = vsyncpa [#allocation4], 0
    %10 = vsyncpa [#allocation7], 0
    %11 = vsyncpa [#allocation5], 0
    // Predicated region
    $region2: #{tpu_custom_call.1} parent=1 // pred_check
      _
    $region3: #{tpu_custom_call.1} parent=1 // pred_check_branch
      %13 = sbr.rel (0) target = $region5
    $region4: #{tpu_custom_call.1} parent=1 // pred_region
      %15 = vsyncadd [#allocation4], 0
      %s17 = sshll.u32 %s0, 4
      %s18 = int_to_ptr.hbm [resolvable:$true] %s17
      %s19 = sshll.u32 [#allocation3], 4
      %s20 = int_to_ptr.vmem [resolvable:$true] %s19
      %22 = dma.hbm_to_vmem [thread:$0]  %s18, 128, %s20, [#allocation4]
    $region5: #{tpu_custom_call.1} parent=1 // pred_fallthru
      _
    // Predicated region
    $region6: #{tpu_custom_call.1} parent=1 // pred_check
      _
    $region7: #{tpu_custom_call.1} parent=1 // pred_check_branch
      %24 = sbr.rel (0) target = $region9
    $region8: #{tpu_custom_call.1} parent=1 // pred_region
      %26 = vsyncadd [#allocation7], 0
      %s28 = sshll.u32 %s1, 4
      %s29 = int_to_ptr.hbm [resolvable:$true] %s28
      %s30 = sshll.u32 [#allocation6], 4
      %s31 = int_to_ptr.vmem [resolvable:$true] %s30
      %33 = dma.hbm_to_vmem [thread:$0]  %s29, 128, %s31, [#allocation7]
    $region9: #{tpu_custom_call.1} parent=1 // pred_fallthru
      _
    // Predicated region
    $region10: #{tpu_custom_call.1} parent=1 // pred_check
      _
    $region11: #{tpu_custom_call.1} parent=1 // pred_check_branch
      %35 = sbr.rel (0) target = $region13
    $region12: #{tpu_custom_call.1} parent=1 // pred_region
      _
    $region13: #{tpu_custom_call.1} parent=1 // pred_fallthru
      _
    // Predicated region
    $region14: #{tpu_custom_call.1} parent=1 // pred_check
      _
    $region15: #{tpu_custom_call.1} parent=1 // pred_check_branch
      %37 = sbr.rel (0) target = $region17
    $region16: #{tpu_custom_call.1} parent=1 // pred_region
      %39 = dma.done [#allocation4], 128
    $region17: #{tpu_custom_call.1} parent=1 // pred_fallthru
      _
    // Predicated region
    $region18: #{tpu_custom_call.1} parent=1 // pred_check
      _
    $region19: #{tpu_custom_call.1} parent=1 // pred_check_branch
      %41 = sbr.rel (0) target = $region21
    $region20: #{tpu_custom_call.1} parent=1 // pred_region
      %43 = dma.done [#allocation7], 128
    $region21: #{tpu_custom_call.1} parent=1 // pred_fallthru
      _
    %v44 = vld [vmem:[#allocation6] sm:$0xff]
    %v45 = vld [vmem:[#allocation3] sm:$0xff]
    %vm46 = vcmask 261120
    %v48 = vsel %vm46, %v44, 0
    %v51 = vsel %vm46, %v45, 0
    %53 = vmatpush.xpose.msra.mxu0 0.0
    %54 = vmatpush.xpose.msra.mxu0 0.0
    %55 = vmatpush.xpose.msra.mxu0 0.0
    %56 = vmatpush.xpose.msra.mxu0 0.0
    %57 = vmatpush.xpose.msra.mxu0 0.0
    %58 = vmatpush.xpose.msra.mxu0 0.0
    %59 = vmatpush.xpose.msra.mxu0 0.0
    %60 = vmatpush.xpose.msra.mxu0 0.0
    %61 = vmatpush.xpose.msra.mxu0 0.0
    %62 = vmatpush.xpose.msra.mxu0 0.0
    %63 = vmatpush.xpose.msra.mxu0 0.0
    %64 = vmatpush.xpose.msra.mxu0 0.0
    %65 = vmatpush.xpose.msra.mxu0 0.0
    %66 = vmatpush.xpose.msra.mxu0 0.0
    %67 = vmatpush.xpose.msra.mxu0 0.0
    %68 = vmatpush.xpose.msra.mxu0 %v51
    %69 = vmatmul.f32.gmra.mxu0 %v48
    %v70 = vpop.f32.mrf.mxu0
    %v71 = vadd.f32 0.0, %v70
    %72 = vdwg.mxu0
    %s73 = sld [smem:[#allocation2]]
    %v74 = vstv %s73
    %v75 = vadd.f32 %v71, %v74
    %v76 = vmax.f32 %v75, -16.118095
    %v77 = vmin.f32 %v76, 16.118095
    %vm78 = vcmask 57344
    %79 = vst.msk [vmem:[#allocation8] sm:$0x1] %vm78, %v77
    // Predicated region
    $region22: #{tpu_custom_call.1} parent=1 // pred_check
      _
    $region23: #{tpu_custom_call.1} parent=1 // pred_check_branch
      %81 = sbr.rel (0) target = $region25
    $region24: #{tpu_custom_call.1} parent=1 // pred_region
      %83 = vsyncadd [#allocation5], 0
      %s85 = sshll.u32 [#allocation8], 4
      %s86 = int_to_ptr.vmem [resolvable:$true] %s85
      %s87 = sshll.u32 %s3, 4
      %s88 = int_to_ptr.hbm [resolvable:$true] %s87
      %90 = dma.vmem_to_hbm [thread:$0]  %s86, 16, %s88, [#allocation5]
    $region25: #{tpu_custom_call.1} parent=1 // pred_fallthru
      _
    // Predicated region
    $region26: #{tpu_custom_call.1} parent=1 // pred_check
      _
    $region27: #{tpu_custom_call.1} parent=1 // pred_check_branch
      %92 = sbr.rel (0) target = $region29
    $region28: #{tpu_custom_call.1} parent=1 // pred_region
      %94 = dma.done [#allocation5], 16
    $region29: #{tpu_custom_call.1} parent=1 // pred_fallthru
      _
    %95 = vsyncpa [#allocation4], 1
    %96 = vsyncpa [#allocation7], 1
    %97 = vsyncpa [#allocation5], 1

</llo_original>
